<compile_context>
chip_gen: v6e
topology: v6e:2x2x1
jax: 0.10.0
libtpu: 0.0.40
codegen_flags: <defaults>
</compile_context>

<pallas_src>
import functools

import jax
import jax.numpy as jnp
from jax.experimental import pallas as pl
from jax.experimental.pallas import tpu as pltpu

BN_EPS = 1e-5


def _round_up(v, m):
    return (v + m - 1) // m * m


def _vmem_limit_bytes():
    """Generation-aware VMEM limit (v7x: 64 MiB physical; v5e/v6e: 128 MiB)."""
    try:
        cap = pltpu.get_tpu_info().vmem_capacity_bytes
    except Exception:  # unknown chip / query unavailable: assume the smallest (v7x)
        cap = 64 * 1024 * 1024
    return min(int(cap * 3 // 4), 100 * 1024 * 1024)


def _pick_feature_tile(f_pad):
    """Prefer 256/512-wide tiles (v6e/v7x MXU is 256 wide); keep >=2 tiles when possible
    so v7x's two TensorCores both get work on the 'parallel' axis."""
    if f_pad <= 256:
        return f_pad
    for t in (512, 256, 128):
        if f_pad % t == 0 and f_pad // t >= 2:
            return t
    return 128


def _pick_k_tile(k_pad):
    for t in (512, 256, 128):
        if k_pad % t == 0:
            return t
    return 128


def _bn_relu(y, gamma, beta, inv_n, activation):
    """Training-mode BatchNorm1d (biased batch stats) + optional ReLU, all f32."""
    mean = jnp.sum(y, axis=0, keepdims=True) * inv_n
    centered = y - mean
    var = jnp.sum(centered * centered, axis=0, keepdims=True) * inv_n
    scale = gamma * jax.lax.rsqrt(var + BN_EPS)          # rsqrt -> EUP slot
    out = centered * scale + beta
    if activation:
        out = jnp.maximum(out, 0.0)
    return out


def _kernel_resident(x_ref, w_ref, b_ref, g_ref, be_ref, o_ref, *, activation, inv_n):
    # x is resident in VMEM (constant index map -> DMA'd from HBM exactly once);
    # cast to bf16 at the MXU input, accumulate in f32.
    x_bf = x_ref[...].astype(jnp.bfloat16)
    y = jnp.dot(x_bf, w_ref[...], preferred_element_type=jnp.float32) + b_ref[...]
    o_ref[...] = _bn_relu(y, g_ref[...], be_ref[...], inv_n, activation).astype(o_ref.dtype)


def _kernel_ktiled(x_ref, w_ref, b_ref, g_ref, be_ref, o_ref, *, activation, inv_n):
    k = pl.program_id(1)

    @pl.when(k == 0)
    def _init():
        o_ref[...] = jnp.zeros_like(o_ref)

    # Accumulate directly into the f32, K-resident output block (no scratch).
    x_bf = x_ref[...].astype(jnp.bfloat16)
    o_ref[...] += jnp.dot(x_bf, w_ref[...], preferred_element_type=jnp.float32)

    @pl.when(k == pl.num_programs(1) - 1)
    def _finalize():
        y = o_ref[...] + b_ref[...]
        o_ref[...] = _bn_relu(y, g_ref[...], be_ref[...], inv_n, activation).astype(o_ref.dtype)


def mlp_block(x, w, b, gamma, beta, *, activation=True, tn=None, tk=None):
    """x: (N, in_features) f32; w: (in_features, out_features) bf16 (pre-transposed);
    b / gamma / beta: (1, out_features) f32.  Returns (N, out_features) f32."""
    n, k_in = x.shape
    f_out = w.shape[1]
    inv_n = 1.0 / n                                   # true batch size: BN stats exact

    if w.dtype != jnp.bfloat16:                       # static dtype check (no-op if bf16)
        w = w.astype(jnp.bfloat16)

    vmem_limit = _vmem_limit_bytes()
    fit_budget = int(vmem_limit * 0.7)

    tn_given = tn is not None
    if tn_given:
        f_pad = _round_up(f_out, tn)
    else:
        f_pad = _round_up(f_out, 128)
        tn = _pick_feature_tile(f_pad)

    # Pad the feature dimension (zero weight columns -> padded outputs are exactly 0,
    # gamma/beta padded with 0 keep them 0; sliced off at the end).
    def _pad_feat(v):
        return jnp.pad(v, ((0, 0), (0, f_pad - f_out))) if f_pad != f_out else v

    w_p = _pad_feat(w)
    b_p, g_p, be_p = _pad_feat(b), _pad_feat(gamma), _pad_feat(beta)

    bn_flops = 10 * n * f_pad

    # -------- regime selection: resident x (no K tiling) vs K-tiled reduction -------
    resident_need = (2 * n * k_in * 4        # x f32 (count double-buffer conservatively)
                     + 2 * k_in * tn * 2     # bf16 weight column tile, double-buffered
                     + 2 * n * tn * 4        # f32 output tile, double-buffered
                     + 6 * tn * 4)           # bias/gamma/beta
    use_resident = (tk is None) and (resident_need <= fit_budget)

    if use_resident:
        grid = (f_pad // tn,)
        in_specs = [
            pl.BlockSpec((n, k_in), lambda j: (0, 0)),    # x resident: loaded once
            pl.BlockSpec((k_in, tn), lambda j: (0, j)),   # full-K weight column tile
            pl.BlockSpec((1, tn), lambda j: (0, j)),      # bias
            pl.BlockSpec((1, tn), lambda j: (0, j)),      # gamma
            pl.BlockSpec((1, tn), lambda j: (0, j)),      # beta
        ]
        out_specs = pl.BlockSpec((n, tn), lambda j: (0, j))
        dim_sem = ("parallel",)
        kernel = functools.partial(_kernel_resident, activation=activation, inv_n=inv_n)
        x_in, w_in = x, w_p
        bytes_accessed = n * k_in * 4 + k_in * f_pad * 2 + n * f_pad * 4 + 3 * f_pad * 4
        flops = 2 * n * k_in * f_pad + bn_flops
    else:
        k_pad = _round_up(k_in, 128)
        tk_given = tk is not None
        if tk_given:
            k_pad = _round_up(k_in, tk)
        else:
            tk = _pick_k_tile(k_pad)
            # Shrink auto-picked tiles until the double-buffered working set fits VMEM.
            if not tn_given:
                while (2 * (n * tk * 4 + tk * tn * 2 + n * tn * 4) > fit_budget
                       and (tn > 128 or tk > 128)):
                    if tk >= tn and tk > 128:
                        tk //= 2
                    elif tn > 128:
                        tn //= 2
                    else:
                        tk //= 2

        x_in = jnp.pad(x, ((0, 0), (0, k_pad - k_in))) if k_pad != k_in else x
        w_in = jnp.pad(w_p, ((0, k_pad - k_in), (0, 0))) if k_pad != k_in else w_p

        grid = (f_pad // tn, k_pad // tk)                 # reduction axis (K) last
        in_specs = [
            pl.BlockSpec((n, tk), lambda j, kk: (0, kk)),
            pl.BlockSpec((tk, tn), lambda j, kk: (kk, j)),
            pl.BlockSpec((1, tn), lambda j, kk: (0, j)),
            pl.BlockSpec((1, tn), lambda j, kk: (0, j)),
            pl.BlockSpec((1, tn), lambda j, kk: (0, j)),
        ]
        out_specs = pl.BlockSpec((n, tn), lambda j, kk: (0, j))   # resident across K
        dim_sem = ("parallel", "arbitrary")
        kernel = functools.partial(_kernel_ktiled, activation=activation, inv_n=inv_n)
        bytes_accessed = ((f_pad // tn) * n * k_pad * 4   # x re-streamed per feature tile
                          + k_pad * f_pad * 2 + n * f_pad * 4 + 3 * f_pad * 4)
        flops = 2 * n * k_pad * f_pad + bn_flops

    cost = pl.CostEstimate(flops=flops, transcendentals=f_pad,
                           bytes_accessed=bytes_accessed)

    out_padded = pl.pallas_call(
        kernel,
        out_shape=jax.ShapeDtypeStruct((n, f_pad), jnp.float32),
        grid_spec=pltpu.PrefetchScalarGridSpec(
            num_scalar_prefetch=0,
            grid=grid,
            in_specs=in_specs,
            out_specs=out_specs,
        ),
        compiler_params=pltpu.CompilerParams(
            dimension_semantics=dim_sem,
            vmem_limit_bytes=vmem_limit,
        ),
        cost_estimate=cost,
    )(x_in, w_in, b_p, g_p, be_p)

    return out_padded[:, :f_out] if f_pad != f_out else out_padded


def init_params(key, in_features, out_features):
    """Mirror PyTorch defaults (Linear + fresh BatchNorm1d); weight stored bf16."""
    kw, kb = jax.random.split(key)
    bound = 1.0 / (in_features ** 0.5)
    # PyTorch Linear weight is (out, in); store its transpose (in, out), bf16 for the MXU.
    w = jax.random.uniform(kw, (in_features, out_features), jnp.float32, -bound, bound)
    w = w.astype(jnp.bfloat16)
    b = jax.random.uniform(kb, (1, out_features), jnp.float32, -bound, bound)
    gamma = jnp.ones((1, out_features), jnp.float32)    # BatchNorm1d weight
    beta = jnp.zeros((1, out_features), jnp.float32)    # BatchNorm1d bias
    return w, b, gamma, beta


def reference(x, w, b, gamma, beta, activation=True):
    # Same bf16-rounded operands as the kernel, f32 accumulation / BN math.
    y = x.astype(jnp.bfloat16).astype(jnp.float32) @ w.astype(jnp.float32) + b
    mean = jnp.mean(y, axis=0, keepdims=True)
    var = jnp.mean((y - mean) ** 2, axis=0, keepdims=True)
    out = (y - mean) * jax.lax.rsqrt(var + BN_EPS) * gamma + beta
    return jnp.maximum(out, 0.0) if activation else out


if __name__ == "__main__":
    key = jax.random.PRNGKey(0)
    k_x, k_p, k_x2, k_p2 = jax.random.split(key, 4)

    # Small shapes consistent with the module: x is (batch, in_features).
    batch, in_features, out_features = 8, 16, 32
    x = jax.random.normal(k_x, (batch, in_features), jnp.float32)
    w, b, gamma, beta = init_params(k_p, in_features, out_features)

    # Resident-x regime (Linear -> BN -> ReLU).
    out = jax.block_until_ready(mlp_block(x, w, b, gamma, beta, activation=True))
    ref = reference(x, w, b, gamma, beta, activation=True)
    assert out.shape == (batch, out_features)
    assert jnp.allclose(out, ref, atol=2e-3, rtol=2e-3), "mismatch vs reference (ReLU)"

    # Identity (activation=False) path.
    out2 = jax.block_until_ready(mlp_block(x, w, b, gamma, beta, activation=False))
    ref2 = reference(x, w, b, gamma, beta, activation=False)
    assert jnp.allclose(out2, ref2, atol=2e-3, rtol=2e-3), "mismatch vs reference (Identity)"

    # Also exercise the K-tiled accumulation regime (forced via explicit tiles).
    batch2, in2, outf2 = 16, 256, 256
    x2 = jax.random.normal(k_x2, (batch2, in2), jnp.float32)
    w2, b2, g2, be2 = init_params(k_p2, in2, outf2)
    out3 = jax.block_until_ready(
        mlp_block(x2, w2, b2, g2, be2, activation=True, tn=128, tk=128))
    ref3 = reference(x2, w2, b2, g2, be2, activation=True)
    assert out3.shape == (batch2, outf2)
    assert jnp.allclose(out3, ref3, atol=2e-3, rtol=2e-3), "mismatch vs reference (K-tiled)"

    print("KERNEL_OK")
</pallas_src>

<mosaic_0001>
module attributes {stable_mosaic.version = 11 : i64} {
  func.func @_kernel_resident(%arg0: i32, %arg1: memref<8x16xf32, #tpu.memory_space<vmem>>, %arg2: memref<16x128xbf16, #tpu.memory_space<vmem>>, %arg3: memref<1x128xf32, #tpu.memory_space<vmem>>, %arg4: memref<1x128xf32, #tpu.memory_space<vmem>>, %arg5: memref<1x128xf32, #tpu.memory_space<vmem>>, %arg6: memref<8x128xf32, #tpu.memory_space<vmem>>) attributes {dimension_semantics = [#tpu.dimension_semantics<parallel>], iteration_bounds = array<i64: 1>, scalar_prefetch = 0 : i64, scratch_operands = 0 : i64, tpu.core_type = #tpu.core_type<tc>, window_params = [{pipeline_mode = #tpu.pipeline_mode<synchronous>, transform_indices = @transform_0, window_bounds = array<i64: 8, 16>}, {transform_indices = @transform_1, window_bounds = array<i64: 16, 128>}, {transform_indices = @transform_2, window_bounds = array<i64: 1, 128>}, {transform_indices = @transform_3, window_bounds = array<i64: 1, 128>}, {transform_indices = @transform_4, window_bounds = array<i64: 1, 128>}, {transform_indices = @transform_5, window_bounds = array<i64: 8, 128>}]} {
    %c0 = arith.constant 0 : index
    %c0_0 = arith.constant 0 : index
    %0 = vector.load %arg1[%c0, %c0_0] : memref<8x16xf32, #tpu.memory_space<vmem>>, vector<8x16xf32>
    %1 = arith.truncf %0 : vector<8x16xf32> to vector<8x16xbf16>
    %c0_1 = arith.constant 0 : index
    %c0_2 = arith.constant 0 : index
    %2 = vector.load %arg2[%c0_1, %c0_2] : memref<16x128xbf16, #tpu.memory_space<vmem>>, vector<16x128xbf16>
    %cst = arith.constant dense<0.000000e+00> : vector<8x128xf32>
    %3 = tpu.matmul %1, %2, %cst {dimension_numbers = #tpu.dot_dimension_numbers<[1], [0], [0], [1], [0, 0, 1, 1], [], []>} : vector<8x16xbf16>, vector<16x128xbf16>, vector<8x128xf32> -> vector<8x128xf32>
    %c0_3 = arith.constant 0 : index
    %c0_4 = arith.constant 0 : index
    %4 = vector.load %arg3[%c0_3, %c0_4] : memref<1x128xf32, #tpu.memory_space<vmem>>, vector<1x128xf32>
    %5 = vector.broadcast %4 : vector<1x128xf32> to vector<8x128xf32>
    %6 = arith.addf %3, %5 : vector<8x128xf32>
    %c0_5 = arith.constant 0 : index
    %c0_6 = arith.constant 0 : index
    %7 = vector.load %arg4[%c0_5, %c0_6] : memref<1x128xf32, #tpu.memory_space<vmem>>, vector<1x128xf32>
    %c0_7 = arith.constant 0 : index
    %c0_8 = arith.constant 0 : index
    %8 = vector.load %arg5[%c0_7, %c0_8] : memref<1x128xf32, #tpu.memory_space<vmem>>, vector<1x128xf32>
    %cst_9 = arith.constant dense<0.000000e+00> : vector<128xf32>
    %9 = vector.multi_reduction <add>, %6, %cst_9 [0] : vector<8x128xf32> to vector<128xf32>
    %10 = vector.shape_cast %9 : vector<128xf32> to vector<1x128xf32>
    %cst_10 = arith.constant 1.250000e-01 : f32
    %11 = vector.broadcast %cst_10 : f32 to vector<1x128xf32>
    %12 = arith.mulf %10, %11 : vector<1x128xf32>
    %13 = vector.broadcast %12 : vector<1x128xf32> to vector<8x128xf32>
    %14 = arith.subf %6, %13 : vector<8x128xf32>
    %15 = arith.mulf %14, %14 : vector<8x128xf32>
    %cst_11 = arith.constant dense<0.000000e+00> : vector<128xf32>
    %16 = vector.multi_reduction <add>, %15, %cst_11 [0] : vector<8x128xf32> to vector<128xf32>
    %17 = vector.shape_cast %16 : vector<128xf32> to vector<1x128xf32>
    %cst_12 = arith.constant 1.250000e-01 : f32
    %18 = vector.broadcast %cst_12 : f32 to vector<1x128xf32>
    %19 = arith.mulf %17, %18 : vector<1x128xf32>
    %cst_13 = arith.constant 9.99999974E-6 : f32
    %20 = vector.broadcast %cst_13 : f32 to vector<1x128xf32>
    %21 = arith.addf %19, %20 : vector<1x128xf32>
    %22 = math.rsqrt %21 : vector<1x128xf32>
    %23 = arith.mulf %7, %22 : vector<1x128xf32>
    %24 = vector.broadcast %23 : vector<1x128xf32> to vector<8x128xf32>
    %25 = arith.mulf %14, %24 : vector<8x128xf32>
    %26 = vector.broadcast %8 : vector<1x128xf32> to vector<8x128xf32>
    %27 = arith.addf %25, %26 : vector<8x128xf32>
    %cst_14 = arith.constant 0.000000e+00 : f32
    %28 = vector.broadcast %cst_14 : f32 to vector<8x128xf32>
    %29 = arith.maximumf %27, %28 : vector<8x128xf32>
    %c0_15 = arith.constant 0 : index
    %c0_16 = arith.constant 0 : index
    %30 = vector.load %arg6[%c0_15, %c0_16] : memref<8x128xf32, #tpu.memory_space<vmem>>, vector<8x128xf32>
    tpu.vector_store %arg6[%c0_15, %c0_16], %29 {strides = array<i32>} : memref<8x128xf32, #tpu.memory_space<vmem>>, vector<8x128xf32>,
    return
  }
  func.func @transform_0(%arg0: i32) -> (i32, i32) {
    %c0_i32 = arith.constant 0 : i32
    %c0_i32_0 = arith.constant 0 : i32
    %c0_i32_1 = arith.constant 0 : i32
    return %c0_i32, %c0_i32_0 : i32, i32
  }
  func.func @transform_1(%arg0: i32) -> (i32, i32) {
    %c0_i32 = arith.constant 0 : i32
    %c0_i32_0 = arith.constant 0 : i32
    return %c0_i32, %arg0 : i32, i32
  }
  func.func @transform_2(%arg0: i32) -> (i32, i32) {
    %c0_i32 = arith.constant 0 : i32
    %c0_i32_0 = arith.constant 0 : i32
    return %c0_i32, %arg0 : i32, i32
  }
  func.func @transform_3(%arg0: i32) -> (i32, i32) {
    %c0_i32 = arith.constant 0 : i32
    %c0_i32_0 = arith.constant 0 : i32
    return %c0_i32, %arg0 : i32, i32
  }
  func.func @transform_4(%arg0: i32) -> (i32, i32) {
    %c0_i32 = arith.constant 0 : i32
    %c0_i32_0 = arith.constant 0 : i32
    return %c0_i32, %arg0 : i32, i32
  }
  func.func @transform_5(%arg0: i32) -> (i32, i32) {
    %c0_i32 = arith.constant 0 : i32
    %c0_i32_0 = arith.constant 0 : i32
    return %c0_i32, %arg0 : i32, i32
  }
}

</mosaic_0001>

<llo_original>
// kernel: tpu_custom_call.1
$region0: #{tpu_custom_call.1}
  #allocation0 [shape = 'u32[]', space=smem, size = 0x4, offset = 0x4, fixed_abs, tag = 'smem constant byte address 0x4 - core index']
  #allocation1 [shape = 'u32[144,128]{1,0:T(1,128)}', space=vmem, size = 0x12000, scoped, tag = 'internal scratch']
  %s0 = inlined_call_operand.hbm [shape: f32[8,16], index: 0, kind: input, shape index: {}]
  %s1 = inlined_call_operand.hbm [shape: bf16[16,128], index: 1, kind: input, shape index: {}]
  %s2 = inlined_call_operand.vmem [shape: f32[1,128], index: 2, kind: input, shape index: {}]
  %s3 = inlined_call_operand.vmem [shape: f32[1,128], index: 3, kind: input, shape index: {}]
  %s4 = inlined_call_operand.vmem [shape: f32[1,128], index: 4, kind: input, shape index: {}]
  %s5 = inlined_call_operand.hbm [shape: f32[8,128], index: 5, kind: output, shape index: {}]
  %s6 = sld [smem:[#allocation0]]
  $region38: #{tpu_custom_call.1} parent=0
    _
  %s8 = ssub.s32 1, %s6
  %s9 = scalar_select 0, %s8, %s6
  $region1: #{tpu_custom_call.1} parent=0
    #allocation2 [shape = 'u8[4096]{0}', space=vmem, size = 0x1000, scoped, tag = 'input window, operand 0, single buffered']
    #allocation3 [shape = 's32[1]{0}', space=sflag, size = 0x4, scoped, tag = 'scoped memory for tpu_custom_call.1']
    #allocation4 [shape = 's32[1]{0}', space=sflag, size = 0x4, scoped, tag = 'scoped memory for tpu_custom_call.1']
    #allocation5 [shape = 'u8[4096]{0}', space=vmem, size = 0x1000, scoped, tag = 'input window, operand 1, single buffered']
    #allocation6 [shape = 's32[1]{0}', space=sflag, size = 0x4, scoped, tag = 'scoped memory for tpu_custom_call.1']
    #allocation7 [shape = 'u8[4096]{0}', space=vmem, size = 0x1000, scoped, tag = 'output window, operand 0, single buffered']
    %10 = vsyncpa [#allocation3], 0
    %11 = vsyncpa [#allocation6], 0
    %12 = vsyncpa [#allocation4], 0
    // Predicated region
    $region2: #{tpu_custom_call.1} parent=1 // pred_check
      _
    $region3: #{tpu_custom_call.1} parent=1 // pred_check_branch
      %14 = sbr.rel (0) target = $region5
    $region4: #{tpu_custom_call.1} parent=1 // pred_region
      %s16 = ssub.s32 128, 128
      %17 = vsyncadd [#allocation3], %s16
      %s19 = sshll.u32 [#allocation2], 4
      %s20 = int_to_ptr.vmem [resolvable:$true] %s19
      %22 = dma.hbm_to_vmem [thread:$0]  %s0, 128, %s20, [#allocation3]
    $region5: #{tpu_custom_call.1} parent=1 // pred_fallthru
      _
    // Predicated region
    $region6: #{tpu_custom_call.1} parent=1 // pred_check
      _
    $region7: #{tpu_custom_call.1} parent=1 // pred_check_branch
      %24 = sbr.rel (0) target = $region9
    $region8: #{tpu_custom_call.1} parent=1 // pred_region
      %s26 = ssub.s32 128, 128
      %27 = vsyncadd [#allocation6], %s26
      %s28 = sshll.u32 [#allocation5], 4
      %s29 = int_to_ptr.vmem [resolvable:$true] %s28
      %34 = dma.hbm_to_vmem [thread:$0]  %s1, 128, %s29, [#allocation6], 64, 64, 4
    $region9: #{tpu_custom_call.1} parent=1 // pred_fallthru
      _
    // Predicated region
    $region10: #{tpu_custom_call.1} parent=1 // pred_check
      _
    $region11: #{tpu_custom_call.1} parent=1 // pred_check_branch
      %36 = sbr.rel (0) target = $region13
    $region12: #{tpu_custom_call.1} parent=1 // pred_region
      _
    $region13: #{tpu_custom_call.1} parent=1 // pred_fallthru
      _
    // Predicated region
    $region14: #{tpu_custom_call.1} parent=1 // pred_check
      _
    $region15: #{tpu_custom_call.1} parent=1 // pred_check_branch
      %38 = sbr.rel (0) target = $region17
    $region16: #{tpu_custom_call.1} parent=1 // pred_region
      _
    $region17: #{tpu_custom_call.1} parent=1 // pred_fallthru
      _
    // Predicated region
    $region18: #{tpu_custom_call.1} parent=1 // pred_check
      _
    $region19: #{tpu_custom_call.1} parent=1 // pred_check_branch
      %40 = sbr.rel (0) target = $region21
    $region20: #{tpu_custom_call.1} parent=1 // pred_region
      _
    $region21: #{tpu_custom_call.1} parent=1 // pred_fallthru
      _
    // Predicated region
    $region22: #{tpu_custom_call.1} parent=1 // pred_check
      _
    $region23: #{tpu_custom_call.1} parent=1 // pred_check_branch
      %42 = sbr.rel (0) target = $region25
    $region24: #{tpu_custom_call.1} parent=1 // pred_region
      %43 = dma.done [#allocation3], 128
    $region25: #{tpu_custom_call.1} parent=1 // pred_fallthru
      _
    // Predicated region
    $region26: #{tpu_custom_call.1} parent=1 // pred_check
      _
    $region27: #{tpu_custom_call.1} parent=1 // pred_check_branch
      %45 = sbr.rel (0) target = $region29
    $region28: #{tpu_custom_call.1} parent=1 // pred_region
      %46 = dma.done [#allocation6], 128
    $region29: #{tpu_custom_call.1} parent=1 // pred_fallthru
      _
    %v48 = vld [vmem:[#allocation2] sm:$0xff]
    %v49 = vpack.c.bf16 %v48, %v48
    %v50 = vld [vmem:[#allocation5] sm:$0xf]
    %v51 = vld [vmem:[#allocation5 + $0x4] sm:$0xf]
    %v52 = vld [vmem:[%s2] sm:$0x1]
    %v54 = vlaneseq
    %v55 = vshrl.u32 %v54, 7
    %v56 = vsub.s32 0, %v55
    %v57 = vrot.slane %v52, %v56
    %v61 = vunpack.c.l.b16 %v50
    %v62 = vunpack.c.l.b16 %v51
    %v63 = vpack.c.b16 %v62, %v61
    %vm65 = vcmask 130048
    %v67 = vsel %vm65, %v49, 0
    %69 = vmatprep.subr.bf16.mxu0 0
    %70 = vmatpush1.bf16.msra.mxu0 0
    %71 = vmatprep.subr.bf16.mxu0 0
    %72 = vmatpush1.bf16.msra.mxu0 0
    %73 = vmatprep.subr.bf16.mxu0 0
    %74 = vmatpush1.bf16.msra.mxu0 0
    %75 = vmatprep.subr.bf16.mxu0 0
    %76 = vmatpush1.bf16.msra.mxu0 0
    %77 = vmatprep.subr.bf16.mxu0 0
    %78 = vmatpush1.bf16.msra.mxu0 0
    %79 = vmatprep.subr.bf16.mxu0 0
    %80 = vmatpush1.bf16.msra.mxu0 0
    %81 = vmatprep.subr.bf16.mxu0 0
    %82 = vmatpush1.bf16.msra.mxu0 0
    %83 = vmatprep.subr.bf16.mxu0 0
    %84 = vmatpush1.bf16.msra.mxu0 %v63
    %85 = vmatprep.subr.bf16.mxu0 0
    %86 = vmatpush2.bf16.msra.mxu0 0
    %87 = vmatprep.subr.bf16.mxu0 0
    %88 = vmatpush2.bf16.msra.mxu0 0
    %89 = vmatprep.subr.bf16.mxu0 0
    %90 = vmatpush2.bf16.msra.mxu0 0
    %91 = vmatprep.subr.bf16.mxu0 0
    %92 = vmatpush2.bf16.msra.mxu0 0
    %93 = vmatprep.subr.bf16.mxu0 0
    %94 = vmatpush2.bf16.msra.mxu0 0
    %95 = vmatprep.subr.bf16.mxu0 0
    %96 = vmatpush2.bf16.msra.mxu0 0
    %97 = vmatprep.subr.bf16.mxu0 0
    %98 = vmatpush2.bf16.msra.mxu0 0
    %99 = vmatprep.subr.bf16.mxu0 0
    %100 = vmatpush2.bf16.msra.mxu0 0
    %101 = vmatprep.mubr.bf16.mxu0 0
    %102 = vmatmul.mubr.bf16.gmra.mxu0 %v67
    %v103 = vpop.f32.mrf.mxu0
    %v104 = vadd.f32 %v57, %v103
    %v105 = vpop.f32.mrf.mxu0
    %v106 = vpop.f32.mrf.mxu0
    %v107 = vpop.f32.mrf.mxu0
    %108 = vdwg.mxu0
    %v109 = vld [vmem:[%s3] sm:$0x1]
    %v110 = vld [vmem:[%s4] sm:$0x1]
    %v111 = vrot.slane %v104, 4
    %v112 = vadd.f32 %v104, %v111
    %v113 = vrot.slane %v112, 2
    %v114 = vadd.f32 %v112, %v113
    %v115 = vrot.slane %v114, 1
    %v116 = vadd.f32 %v114, %v115
    %v117 = vmul.f32 %v116, 0.125
    %v118 = vsub.f32 %v104, %v117
    %v119 = vmul.f32 %v118, %v118
    %v120 = vrot.slane %v119, 4
    %v121 = vadd.f32 %v119, %v120
    %v122 = vrot.slane %v121, 2
    %v123 = vadd.f32 %v121, %v122
    %v124 = vrot.slane %v123, 1
    %v125 = vadd.f32 %v123, %v124
    %v126 = vmul.f32 %v125, 0.125
    %v127 = vadd.f32 %v126, 1e-05
    %v128 = vrsqrt.pop %v127
    %v129 = vmul.f32 %v109, %v128
    %v131 = vlaneseq
    %v132 = vshrl.u32 %v131, 7
    %v133 = vsub.s32 0, %v132
    %v134 = vrot.slane %v129, %v133
    %v136 = vmul.f32 %v118, %v134
    %v138 = vlaneseq
    %v139 = vshrl.u32 %v138, 7
    %v140 = vsub.s32 0, %v139
    %v141 = vrot.slane %v110, %v140
    %v143 = vadd.f32 %v136, %v141
    %v144 = vmax.f32 %v143, 0.0
    %145 = vst [vmem:[#allocation7] sm:$0xff] %v144
    // Predicated region
    $region30: #{tpu_custom_call.1} parent=1 // pred_check
      _
    $region31: #{tpu_custom_call.1} parent=1 // pred_check_branch
      %147 = sbr.rel (0) target = $region33
    $region32: #{tpu_custom_call.1} parent=1 // pred_region
      %s149 = ssub.s32 128, 128
      %150 = vsyncadd [#allocation4], %s149
      %s152 = sshll.u32 [#allocation7], 4
      %s153 = int_to_ptr.vmem [resolvable:$true] %s152
      %155 = dma.vmem_to_hbm [thread:$0]  %s153, 128, %s5, [#allocation4]
    $region33: #{tpu_custom_call.1} parent=1 // pred_fallthru
      _
    // Predicated region
    $region34: #{tpu_custom_call.1} parent=1 // pred_check
      _
    $region35: #{tpu_custom_call.1} parent=1 // pred_check_branch
      %157 = sbr.rel (0) target = $region37
    $region36: #{tpu_custom_call.1} parent=1 // pred_region
      %158 = dma.done [#allocation4], 128
    $region37: #{tpu_custom_call.1} parent=1 // pred_fallthru
      _
    %159 = vsyncpa [#allocation3], 1
    %160 = vsyncpa [#allocation6], 1
    %161 = vsyncpa [#allocation4], 1

</llo_original>
